<compile_context>
chip_gen: v5e
topology: v5e:2x2
jax: 0.10.0
libtpu: 0.0.40
codegen_flags: <defaults>
</compile_context>

<pallas_src>
import jax
import jax.numpy as jnp
from jax.experimental import pallas as pl
from jax.experimental.pallas import tpu as pltpu

# ---------------- model constants (scaled-down but same structure) ----------------
DIM = 3
N_CLASS = 3            # global_Nclass
N_PLANES = 1           # input feature planes
C_CONV = 16            # SubmanifoldConvolution output channels
K_VOL = 3 ** DIM       # 27 taps
K_PAD = 32             # taps padded to a multiple of 8 (sublane-aligned contraction)
BIAS_TAP = K_VOL       # patches row 27 == 1.0 -> BN shift rides the MXU for free
NVOX = 16              # small spatial grid (original uses 100)
BATCH = 2
N_ACTIVE = 256         # number of active (non-zero) voxels
MAX_TILE_N = 8192      # lanes per grid step (sweep 4096-16384 at production N)


# ---------------------------------- Pallas kernel ----------------------------------
def _scn_head_kernel(p_ref, wc_ref, wl_ref, bl_ref, o_ref):
    # p_ref:  (K_PAD, TILE_N)   bf16  transposed im2col patches; row 27 = 1.0 (bias tap)
    # wc_ref: (C_CONV, K_PAD)   bf16  BN-folded conv weight (T); col 27 = BN shift
    # wl_ref: (N_CLASS, C_CONV) f32   Linear weight (T)
    # bl_ref: (N_CLASS, 1)      f32   Linear bias
    # o_ref:  (N_CLASS, TILE_N) f32   lane-dense output (points on lanes)
    h = jnp.dot(wc_ref[...], p_ref[...], preferred_element_type=jnp.float32)
    h = jnp.maximum(h, 0.0)                                   # BN bias already in matmul
    out = jnp.dot(wl_ref[...], h, preferred_element_type=jnp.float32) + bl_ref[...]
    o_ref[...] = out.astype(o_ref.dtype)


@jax.jit
def scn_head(patches_t, wc_t, wl_t, bl):
    """patches_t: [K_PAD, N] bf16 -> returns [N_CLASS, N] f32."""
    k_pad, n = patches_t.shape
    # lane-align, then pick the tile: multiple of 128, capped at MAX_TILE_N, and
    # >= 2 grid steps when possible (v7x megacore shards the 'parallel' axis).
    n_lane = pl.cdiv(n, 128) * 128
    tile_n = min(MAX_TILE_N, n_lane)
    if n_lane > 128 and n_lane // tile_n < 2:
        tile_n = max(128, pl.cdiv(n_lane // 2, 128) * 128)
    grid_n = pl.cdiv(n_lane, tile_n)
    n_pad = grid_n * tile_n
    if n_pad != n:
        patches_t = jnp.pad(patches_t, ((0, 0), (0, n_pad - n)))

    out = pl.pallas_call(
        _scn_head_kernel,
        out_shape=jax.ShapeDtypeStruct((N_CLASS, n_pad), jnp.float32),
        grid_spec=pltpu.PrefetchScalarGridSpec(
            num_scalar_prefetch=0,
            grid=(grid_n,),
            in_specs=[
                pl.BlockSpec((k_pad, tile_n), lambda i: (0, i)),          # streaming
                pl.BlockSpec((C_CONV, k_pad), lambda i: (0, 0)),          # VMEM-resident
                pl.BlockSpec((N_CLASS, C_CONV), lambda i: (0, 0)),
                pl.BlockSpec((N_CLASS, 1), lambda i: (0, 0)),
            ],
            out_specs=pl.BlockSpec((N_CLASS, tile_n), lambda i: (0, i)),
        ),
        compiler_params=pltpu.CompilerParams(
            dimension_semantics=("parallel",)),
    )(patches_t, wc_t, wl_t, bl)
    return out[:, :n]


# --------------------------- glue: sparse -> im2col patches ------------------------
def build_patches_t(coords, feats):
    """coords: [N,4] int32 (b,z,y,x); feats: [N,1] f32
    -> [K_PAD, N] f32 patches built directly in transposed (taps, points) layout;
       row BIAS_TAP = 1.0 (bias tap), rows 28..31 = 0."""
    b, z, y, x = coords[:, 0], coords[:, 1], coords[:, 2], coords[:, 3]
    # dense grid with 1-voxel halo of zeros (inactive voxels contribute zero)
    dense = jnp.zeros((BATCH, NVOX + 2, NVOX + 2, NVOX + 2), jnp.float32)
    dense = dense.at[b, z + 1, y + 1, x + 1].set(feats[:, 0])
    # 27 neighborhood offsets (dz, dy, dx), row-major over the 3x3x3 kernel
    offs = jnp.arange(K_VOL)
    dz = offs // 9 - 1
    dy = (offs // 3) % 3 - 1
    dx = offs % 3 - 1
    # gather directly in [27, N] layout (no later transpose/relayout pass)
    pt = dense[b[None, :],
               z[None, :] + 1 + dz[:, None],
               y[None, :] + 1 + dy[:, None],
               x[None, :] + 1 + dx[:, None]]                        # [27, N]
    n = pt.shape[1]
    ones = jnp.ones((1, n), jnp.float32)                            # bias tap
    zeros = jnp.zeros((K_PAD - K_VOL - 1, n), jnp.float32)
    return jnp.concatenate([pt, ones, zeros], axis=0)               # [32, N]


# -------------------------------------- main ---------------------------------------
if __name__ == "__main__":
    key = jax.random.PRNGKey(0)
    k_coord, k_feat, k_wc, k_wl, k_bl = jax.random.split(key, 5)

    # unique active voxel sites across the batch (replace=False -> no duplicate sites;
    # real data would need dedup before the dense scatter)
    flat_ids = jax.random.choice(k_coord, BATCH * NVOX * NVOX * NVOX,
                                 shape=(N_ACTIVE,), replace=False)
    b = flat_ids // (NVOX ** 3)
    rem = flat_ids % (NVOX ** 3)
    z = rem // (NVOX * NVOX)
    y = (rem // NVOX) % NVOX
    x = rem % NVOX
    coords = jnp.stack([b, z, y, x], axis=-1).astype(jnp.int32)     # [N,4]
    feats = jax.random.normal(k_feat, (N_ACTIVE, N_PLANES), jnp.float32)

    # deterministic synthetic parameters (same shapes as the torch module)
    w_conv = jax.random.normal(k_wc, (K_VOL * N_PLANES, C_CONV), jnp.float32) * 0.2
    gamma = 1.0 + 0.05 * jnp.arange(C_CONV, dtype=jnp.float32)
    beta = 0.01 * jnp.arange(C_CONV, dtype=jnp.float32)
    run_mean = 0.02 * jnp.arange(C_CONV, dtype=jnp.float32)
    run_var = 1.0 + 0.1 * jnp.arange(C_CONV, dtype=jnp.float32)
    eps = 1e-4
    bn_scale = (gamma / jnp.sqrt(run_var + eps)).reshape(1, C_CONV)
    bn_shift = (beta - run_mean * bn_scale[0]).reshape(1, C_CONV)
    w_lin = jax.random.normal(k_wl, (C_CONV, N_CLASS), jnp.float32) * 0.3
    b_lin = jax.random.normal(k_bl, (1, N_CLASS), jnp.float32) * 0.1

    # ---- fold BN (eval) into conv weight + bias tap (done once, outside kernel) ----
    w_conv_fused = w_conv * bn_scale                                   # [27, 16]
    wc_t = (jnp.zeros((C_CONV, K_PAD), jnp.float32)
            .at[:, :K_VOL].set(w_conv_fused.T)
            .at[:, BIAS_TAP].set(bn_shift[0]))                         # [16, 32]
    wl_t = w_lin.T                                                     # [3, 16]
    bl = b_lin.reshape(N_CLASS, 1)                                     # [3, 1]

    # sparse gather -> transposed im2col (glue, stays in XLA at this toy size)
    patches_t_f32 = build_patches_t(coords, feats)                     # [32, N] f32
    patches_t = patches_t_f32.astype(jnp.bfloat16)                     # bf16 stream
    wc_t_bf16 = wc_t.astype(jnp.bfloat16)

    out_t = scn_head(patches_t, wc_t_bf16, wl_t, bl)                   # [3, N]
    out = out_t.T                                                      # [N, 3]
    jax.block_until_ready(out)

    # pure-JAX reference (same math, bf16-rounded matmul operands to mirror the MXU)
    p27 = patches_t_f32[:K_VOL, :N_ACTIVE].T                           # [N, 27]
    p27_r = p27.astype(jnp.bfloat16).astype(jnp.float32)
    wf_r = w_conv_fused.astype(jnp.bfloat16).astype(jnp.float32)
    bs_r = bn_shift.astype(jnp.bfloat16).astype(jnp.float32)
    ref_h = jnp.maximum(p27_r @ wf_r + bs_r, 0.0)
    ref = ref_h @ w_lin + b_lin
    assert out.shape == (N_ACTIVE, N_CLASS)
    assert jnp.allclose(out, ref, atol=1e-2, rtol=1e-2)

    print("KERNEL_OK")
</pallas_src>

<mosaic_0001>
module attributes {stable_mosaic.version = 11 : i64} {
  func.func @_scn_head_kernel(%arg0: i32, %arg1: memref<32x128xbf16, #tpu.memory_space<vmem>>, %arg2: memref<16x32xbf16, #tpu.memory_space<vmem>>, %arg3: memref<3x16xf32, #tpu.memory_space<vmem>>, %arg4: memref<3x1xf32, #tpu.memory_space<vmem>>, %arg5: memref<3x128xf32, #tpu.memory_space<vmem>>) attributes {dimension_semantics = [#tpu.dimension_semantics<parallel>], iteration_bounds = array<i64: 2>, scalar_prefetch = 0 : i64, scratch_operands = 0 : i64, tpu.core_type = #tpu.core_type<tc>, window_params = [{transform_indices = @transform_0, window_bounds = array<i64: 32, 128>}, {pipeline_mode = #tpu.pipeline_mode<synchronous>, transform_indices = @transform_1, window_bounds = array<i64: 16, 32>}, {pipeline_mode = #tpu.pipeline_mode<synchronous>, transform_indices = @transform_2, window_bounds = array<i64: 3, 16>}, {pipeline_mode = #tpu.pipeline_mode<synchronous>, transform_indices = @transform_3, window_bounds = array<i64: 3, 1>}, {transform_indices = @transform_4, window_bounds = array<i64: 3, 128>}]} {
    %c0 = arith.constant 0 : index
    %c0_0 = arith.constant 0 : index
    %0 = vector.load %arg2[%c0, %c0_0] : memref<16x32xbf16, #tpu.memory_space<vmem>>, vector<16x32xbf16>
    %c0_1 = arith.constant 0 : index
    %c0_2 = arith.constant 0 : index
    %1 = vector.load %arg1[%c0_1, %c0_2] : memref<32x128xbf16, #tpu.memory_space<vmem>>, vector<32x128xbf16>
    %cst = arith.constant dense<0.000000e+00> : vector<16x128xf32>
    %2 = tpu.matmul %0, %1, %cst {dimension_numbers = #tpu.dot_dimension_numbers<[1], [0], [0], [1], [0, 0, 1, 1], [], []>} : vector<16x32xbf16>, vector<32x128xbf16>, vector<16x128xf32> -> vector<16x128xf32>
    %cst_3 = arith.constant 0.000000e+00 : f32
    %3 = vector.broadcast %cst_3 : f32 to vector<16x128xf32>
    %4 = arith.maximumf %2, %3 : vector<16x128xf32>
    %c0_4 = arith.constant 0 : index
    %c0_5 = arith.constant 0 : index
    %5 = vector.load %arg3[%c0_4, %c0_5] : memref<3x16xf32, #tpu.memory_space<vmem>>, vector<3x16xf32>
    %cst_6 = arith.constant dense<0.000000e+00> : vector<3x128xf32>
    %6 = tpu.matmul %5, %4, %cst_6 {dimension_numbers = #tpu.dot_dimension_numbers<[1], [0], [0], [1], [0, 0, 1, 1], [], []>} : vector<3x16xf32>, vector<16x128xf32>, vector<3x128xf32> -> vector<3x128xf32>
    %c0_7 = arith.constant 0 : index
    %c0_8 = arith.constant 0 : index
    %7 = vector.load %arg4[%c0_7, %c0_8] : memref<3x1xf32, #tpu.memory_space<vmem>>, vector<3x1xf32>
    %8 = vector.broadcast %7 : vector<3x1xf32> to vector<3x128xf32>
    %9 = arith.addf %6, %8 : vector<3x128xf32>
    %c0_9 = arith.constant 0 : index
    %c0_10 = arith.constant 0 : index
    %10 = vector.load %arg5[%c0_9, %c0_10] : memref<3x128xf32, #tpu.memory_space<vmem>>, vector<3x128xf32>
    tpu.vector_store %arg5[%c0_9, %c0_10], %9 {strides = array<i32>} : memref<3x128xf32, #tpu.memory_space<vmem>>, vector<3x128xf32>,
    return
  }
  func.func @transform_0(%arg0: i32) -> (i32, i32) {
    %c0_i32 = arith.constant 0 : i32
    %c0_i32_0 = arith.constant 0 : i32
    return %c0_i32, %arg0 : i32, i32
  }
  func.func @transform_1(%arg0: i32) -> (i32, i32) {
    %c0_i32 = arith.constant 0 : i32
    %c0_i32_0 = arith.constant 0 : i32
    %c0_i32_1 = arith.constant 0 : i32
    return %c0_i32, %c0_i32_0 : i32, i32
  }
  func.func @transform_2(%arg0: i32) -> (i32, i32) {
    %c0_i32 = arith.constant 0 : i32
    %c0_i32_0 = arith.constant 0 : i32
    %c0_i32_1 = arith.constant 0 : i32
    return %c0_i32, %c0_i32_0 : i32, i32
  }
  func.func @transform_3(%arg0: i32) -> (i32, i32) {
    %c0_i32 = arith.constant 0 : i32
    %c0_i32_0 = arith.constant 0 : i32
    %c0_i32_1 = arith.constant 0 : i32
    return %c0_i32, %c0_i32_0 : i32, i32
  }
  func.func @transform_4(%arg0: i32) -> (i32, i32) {
    %c0_i32 = arith.constant 0 : i32
    %c0_i32_0 = arith.constant 0 : i32
    return %c0_i32, %arg0 : i32, i32
  }
}

</mosaic_0001>

<llo_original>
// kernel: scn_head.1
$region0: #{scn_head.1}
  #allocation0 [shape = 'u32[]', space=smem, size = 0x4, offset = 0x4, fixed_abs, tag = 'smem constant byte address 0x4 - core index']
  #allocation1 [shape = 'u32[72,128]{1,0:T(1,128)}', space=vmem, size = 0x9000, scoped, tag = 'internal scratch']
  %s0 = inlined_call_operand.hbm [shape: bf16[32,256], index: 0, kind: input, shape index: {}]
  %s1 = inlined_call_operand.hbm [shape: bf16[16,32], index: 1, kind: input, shape index: {}]
  %s2 = inlined_call_operand.vmem [shape: f32[3,16], index: 2, kind: input, shape index: {}]
  %s3 = inlined_call_operand.vmem [shape: f32[3,1], index: 3, kind: input, shape index: {}]
  %s4 = inlined_call_operand.hbm [shape: f32[3,256], index: 4, kind: output, shape index: {}]
  %s5 = sld [smem:[#allocation0]]
  $region57: #{scn_head.1} parent=0
    _
  %s7 = ssub.s32 1, %s5
  %s8 = scalar_select 0, %s7, %s5
  $region1: #{scn_head.1} parent=0
    #allocation2 [shape = 'u8[16384]{0}', space=vmem, size = 0x4000, scoped, tag = 'input window, operand 0']
    #allocation3 [shape = 's32[2]{0}', space=sflag, size = 0x8, scoped, tag = 'scoped memory for scn_head.1']
    #allocation4 [shape = 's32[2]{0}', space=sflag, size = 0x8, scoped, tag = 'scoped memory for scn_head.1']
    #allocation5 [shape = 'u8[4096]{0}', space=vmem, size = 0x1000, scoped, tag = 'input window, operand 1, single buffered']
    #allocation6 [shape = 's32[1]{0}', space=sflag, size = 0x4, scoped, tag = 'scoped memory for scn_head.1']
    #allocation7 [shape = 'u8[4096]{0}', space=vmem, size = 0x1000, scoped, tag = 'output window, operand 0']
    %9 = vsyncpa [#allocation3], 0
    %s10 = scalar_lea.sflag [#allocation3], 1
    %11 = vsyncpa %s10, 0
    %12 = vsyncpa [#allocation6], 0
    %13 = vsyncpa [#allocation4], 0
    %s14 = scalar_lea.sflag [#allocation4], 1
    %15 = vsyncpa %s14, 0
    loop: start=0, step=1, limit=4
    $region2: #{scn_head.1} parent=1 // loop_pre_header
      _
    $region3: #{scn_head.1} parent=1 // loop_header
      %s17 = sphi 0, %s21
      %p18 = scmp.ge.s32.totalorder %s17, 4
      %s27 = sphi 0, %s29
      %s30 = sphi 0, %s27
      %s31 = sphi 0, %s30
      %s47 = sphi 0, %s31
      %s51 = sphi 0, %s51
      %s53 = sphi 0, %s51
      %s54 = sphi 0, %s53
      %s68 = sphi 0, %s54
      %s72 = sphi 0, %s72
      %s74 = sphi 0, %s72
      %s75 = sphi 0, %s74
      %s89 = sphi 0, %s75
      %s93 = sphi 0, %s93
      %s95 = sphi 0, %s93
      %s96 = sphi 0, %s95
      %s110 = sphi 0, %s96
      %s116 = sphi 0, %s118
      %s119 = sphi 0, %s116
      %s120 = sphi 0, %s119
      %s136 = sphi 0, %s120
    $region4: #{scn_head.1} parent=1 // loop_header_branch
      %20 = sbr.rel (%p18) target = $region8
    $region5: #{scn_head.1} parent=1 // loop_body
      %s22 = ssub.s32 %s17, 1
      %s23 = ssub.s32 %s17, 2
      %s24 = sadd.s32 %s17, 1
      %s25 = ssub.s32 %s17, %s24
      %p26 = scmp.eq.s32.totalorder %s25, 0
      %s28 = sadd.s32 %s27, 1
      %s29 = scalar_select %p26, %s27, %s28
      %p32 = pneg %p26
      %p33 = scmp.eq.s32.totalorder %s17, 1
      %p34 = por %p32, %p33
      %p35 = scmp.ne.s32.totalorder %s27, %s30
      %p36 = scmp.eq.s32.totalorder %s17, 0
      %p37 = por %p35, %p36
      %p38 = scmp.ne.s32.totalorder %s27, %s30
      %p39 = scmp.eq.s32.totalorder %s22, 1
      %p40 = por %p38, %p39
      %p41 = scmp.ne.s32.totalorder %s30, %s31
      %p42 = scmp.eq.s32.totalorder %s22, 0
      %p43 = por %p41, %p42
      %p44 = scmp.ne.s32.totalorder %s30, %s31
      %p45 = scmp.eq.s32.totalorder %s23, 1
      %p46 = por %p44, %p45
      %p48 = scmp.ne.s32.totalorder %s31, %s47
      %p49 = scmp.eq.s32.totalorder %s23, 0
      %p50 = por %p48, %p49
      %s52 = sadd.s32 %s51, 1
      %p55 = scmp.eq.s32.totalorder %s17, 1
      %p56 = scmp.ne.s32.totalorder %s51, %s53
      %p57 = scmp.eq.s32.totalorder %s17, 0
      %p58 = por %p56, %p57
      %p59 = scmp.ne.s32.totalorder %s51, %s53
      %p60 = scmp.eq.s32.totalorder %s22, 1
      %p61 = por %p59, %p60
      %p62 = scmp.ne.s32.totalorder %s53, %s54
      %p63 = scmp.eq.s32.totalorder %s22, 0
      %p64 = por %p62, %p63
      %p65 = scmp.ne.s32.totalorder %s53, %s54
      %p66 = scmp.eq.s32.totalorder %s23, 1
      %p67 = por %p65, %p66
      %p69 = scmp.ne.s32.totalorder %s54, %s68
      %p70 = scmp.eq.s32.totalorder %s23, 0
      %p71 = por %p69, %p70
      %s73 = sadd.s32 %s72, 1
      %p76 = scmp.eq.s32.totalorder %s17, 1
      %p77 = scmp.ne.s32.totalorder %s72, %s74
      %p78 = scmp.eq.s32.totalorder %s17, 0
      %p79 = por %p77, %p78
      %p80 = scmp.ne.s32.totalorder %s72, %s74
      %p81 = scmp.eq.s32.totalorder %s22, 1
      %p82 = por %p80, %p81
      %p83 = scmp.ne.s32.totalorder %s74, %s75
      %p84 = scmp.eq.s32.totalorder %s22, 0
      %p85 = por %p83, %p84
      %p86 = scmp.ne.s32.totalorder %s74, %s75
      %p87 = scmp.eq.s32.totalorder %s23, 1
      %p88 = por %p86, %p87
      %p90 = scmp.ne.s32.totalorder %s75, %s89
      %p91 = scmp.eq.s32.totalorder %s23, 0
      %p92 = por %p90, %p91
      %s94 = sadd.s32 %s93, 1
      %p97 = scmp.eq.s32.totalorder %s17, 1
      %p98 = scmp.ne.s32.totalorder %s93, %s95
      %p99 = scmp.eq.s32.totalorder %s17, 0
      %p100 = por %p98, %p99
      %p101 = scmp.ne.s32.totalorder %s93, %s95
      %p102 = scmp.eq.s32.totalorder %s22, 1
      %p103 = por %p101, %p102
      %p104 = scmp.ne.s32.totalorder %s95, %s96
      %p105 = scmp.eq.s32.totalorder %s22, 0
      %p106 = por %p104, %p105
      %p107 = scmp.ne.s32.totalorder %s95, %s96
      %p108 = scmp.eq.s32.totalorder %s23, 1
      %p109 = por %p107, %p108
      %p111 = scmp.ne.s32.totalorder %s96, %s110
      %p112 = scmp.eq.s32.totalorder %s23, 0
      %p113 = por %p111, %p112
      %s114 = ssub.s32 %s17, %s24
      %p115 = scmp.eq.s32.totalorder %s114, 0
      %s117 = sadd.s32 %s116, 1
      %s118 = scalar_select %p115, %s116, %s117
      %p121 = pneg %p115
      %p122 = scmp.eq.s32.totalorder %s17, 1
      %p123 = por %p121, %p122
      %p124 = scmp.ne.s32.totalorder %s116, %s119
      %p125 = scmp.eq.s32.totalorder %s17, 0
      %p126 = por %p124, %p125
      %p127 = scmp.ne.s32.totalorder %s116, %s119
      %p128 = scmp.eq.s32.totalorder %s22, 1
      %p129 = por %p127, %p128
      %p130 = scmp.ne.s32.totalorder %s119, %s120
      %p131 = scmp.eq.s32.totalorder %s22, 0
      %p132 = por %p130, %p131
      %p133 = scmp.ne.s32.totalorder %s119, %s120
      %p134 = scmp.eq.s32.totalorder %s23, 1
      %p135 = por %p133, %p134
      %p137 = scmp.ne.s32.totalorder %s120, %s136
      %p138 = scmp.eq.s32.totalorder %s23, 0
      %p139 = por %p137, %p138
      %p140 = scmp.le.s32.totalorder 1, %s17
      %p141 = scmp.lt.s32.totalorder %s17, 3
      %p142 = pnand %p140, %p141
      %p143 = pneg %p142
      // Predicated region
      $region9: #{scn_head.1} parent=5 // pred_check
        _
      $region10: #{scn_head.1} parent=5 // pred_check_branch
        %145 = sbr.rel (%p142) target = $region12
      $region11: #{scn_head.1} parent=5 // pred_region
        %s146 = ssub.s32 %s17, 1
        // Predicated region
        $region13: #{scn_head.1} parent=11 // pred_check
          %p147 = pneg %p64
        $region14: #{scn_head.1} parent=11 // pred_check_branch
          %149 = sbr.rel (%p147) target = $region16
        $region15: #{scn_head.1} parent=11 // pred_region
          %151 = vsyncadd [#allocation6], 0
          %s152 = sshll.u32 %s1, 4
          %s153 = int_to_ptr.hbm [resolvable:$true] %s152
          %s154 = sshll.u32 [#allocation5], 4
          %s155 = int_to_ptr.vmem [resolvable:$true] %s154
          %160 = dma.hbm_to_vmem [thread:$0]  %s153, 128, %s155, [#allocation6], 64, 64, 4
        $region16: #{scn_head.1} parent=11 // pred_fallthru
          _
        // Predicated region
        $region17: #{scn_head.1} parent=11 // pred_check
          %p161 = pneg %p85
        $region18: #{scn_head.1} parent=11 // pred_check_branch
          %163 = sbr.rel (%p161) target = $region20
        $region19: #{scn_head.1} parent=11 // pred_region
          _
        $region20: #{scn_head.1} parent=11 // pred_fallthru
          _
        // Predicated region
        $region21: #{scn_head.1} parent=11 // pred_check
          %p164 = pneg %p106
        $region22: #{scn_head.1} parent=11 // pred_check_branch
          %166 = sbr.rel (%p164) target = $region24
        $region23: #{scn_head.1} parent=11 // pred_region
          _
        $region24: #{scn_head.1} parent=11 // pred_fallthru
          _
      $region12: #{scn_head.1} parent=5 // pred_fallthru
        _
      %p167 = scmp.lt.s32.totalorder %s17, 2
      // Predicated region
      $region25: #{scn_head.1} parent=5 // pred_check
        %p168 = pneg %p167
      $region26: #{scn_head.1} parent=5 // pred_check_branch
        %170 = sbr.rel (%p168) target = $region28
      $region27: #{scn_head.1} parent=5 // pred_region
        // Predicated region
        $region29: #{scn_head.1} parent=27 // pred_check
          %p171 = pneg %p37
        $region30: #{scn_head.1} parent=27 // pred_check_branch
          %173 = sbr.rel (%p171) target = $region32
        $region31: #{scn_head.1} parent=27 // pred_region
          %s174 = sand.u32 %s27, 1
          %s175 = scalar_lea.sflag [#allocation3], %s174
          %s176 = sand.u32 %s27, 1
          %s177 = smul.addr %s176, 16
          %s178 = scalar_lea.vmem [#allocation2], %s177
          %180 = vsyncadd %s175, 0
          %s181 = smul.addr %s17, 4
          %s182 = scalar_lea.hbm %s0, %s181
          %s183 = sshll.u32 %s182, 4
          %s184 = int_to_ptr.hbm [resolvable:$true] %s183
          %s185 = sshll.u32 %s178, 4
          %s186 = int_to_ptr.vmem [resolvable:$true] %s185
          %191 = dma.hbm_to_vmem [thread:$0]  %s184, 256, %s186, %s175, 128, 64, 4
        $region32: #{scn_head.1} parent=27 // pred_fallthru
          _
      $region28: #{scn_head.1} parent=5 // pred_fallthru
        _
      %p192 = scmp.le.s32.totalorder 1, %s17
      %p193 = scmp.lt.s32.totalorder %s17, 3
      %p194 = pnand %p192, %p193
      %p195 = pneg %p194
      // Predicated region
      $region33: #{scn_head.1} parent=5 // pred_check
        _
      $region34: #{scn_head.1} parent=5 // pred_check_branch
        %197 = sbr.rel (%p194) target = $region36
      $region35: #{scn_head.1} parent=5 // pred_region
        %s198 = ssub.s32 %s17, 1
        %s199 = sand.u32 %s30, 1
        %s200 = scalar_lea.sflag [#allocation3], %s199
        %s201 = sand.u32 %s30, 1
        %s202 = smul.addr %s201, 16
        %s203 = scalar_lea.vmem [#allocation2], %s202
        // Predicated region
        $region37: #{scn_head.1} parent=35 // pred_check
          %p204 = pneg %p43
        $region38: #{scn_head.1} parent=35 // pred_check_branch
          %206 = sbr.rel (%p204) target = $region40
        $region39: #{scn_head.1} parent=35 // pred_region
          %208 = dma.done %s200, 256
        $region40: #{scn_head.1} parent=35 // pred_fallthru
          _
        // Predicated region
        $region41: #{scn_head.1} parent=35 // pred_check
          %p209 = pneg %p64
        $region42: #{scn_head.1} parent=35 // pred_check_branch
          %211 = sbr.rel (%p209) target = $region44
        $region43: #{scn_head.1} parent=35 // pred_region
          %213 = dma.done [#allocation6], 128
        $region44: #{scn_head.1} parent=35 // pred_fallthru
          _
        %s214 = sand.u32 %s30, 1
        %s215 = scalar_lea.sflag [#allocation3], %s214
        %s216 = sand.u32 %s30, 1
        %s217 = smul.addr %s216, 16
        %s218 = scalar_lea.vmem [#allocation2], %s217
        %p219 = pneg %p43
        %p220 = pneg %p40
        %p221 = pneg %p64
        %p222 = pneg %p61
        %p223 = pneg %p85
        %p224 = pneg %p82
        %p225 = pneg %p106
        %p226 = pneg %p103
        %p227 = pneg %p132
        %p228 = pneg %p129
        %s229 = sand.u32 %s119, 1
        %s230 = scalar_lea.sflag [#allocation4], %s229
        %s231 = sand.u32 %s119, 1
        %s232 = smul.addr %s231, 4
        %s233 = scalar_lea.vmem [#allocation7], %s232
        %v235 = vld [vmem:[#allocation5] sm:$0xf]
        %v236 = vld [vmem:[#allocation5 + $0x4] sm:$0xf]
        %v237 = vld [vmem:[%s203] sm:$0xf]
        %v238 = vld [vmem:[%s203 + $0x4] sm:$0xf]
        %v239 = vld [vmem:[%s203 + $0x8] sm:$0xf]
        %v240 = vld [vmem:[%s203 + $0xc] sm:$0xf]
        %v243 = vunpack.c.l.b16 %v235
        %v244 = vunpack.c.l.b16 %v236
        %v245 = vpack.c.b16 %v244, %v243
        %v250 = vunpack.c.l.b16 %v237
        %v251 = vunpack.c.l.b16 %v238
        %v252 = vunpack.c.l.b16 %v239
        %v253 = vunpack.c.l.b16 %v240
        %v254 = vpack.c.b16 %v251, %v250
        %v255 = vpack.c.b16 %v253, %v252
        %vm258 = vcmask 261120
        %v260 = vsel %vm258, %v245, 0
        %262 = vmatpush.bf16.msra.mxu0 0
        %263 = vmatpush.bf16.msra.mxu0 0
        %264 = vmatpush.bf16.msra.mxu0 0
        %265 = vmatpush.bf16.msra.mxu0 0
        %266 = vmatpush.bf16.msra.mxu0 0
        %267 = vmatpush.bf16.msra.mxu0 0
        %268 = vmatpush.bf16.msra.mxu0 %v255
        %269 = vmatpush.bf16.msra.mxu0 %v254
        %270 = vmatmul.bf16.gmra.mxu0 %v260
        %v271 = vpop.f32.mrf.mxu0
        %v272 = vadd.f32 0.0, %v271
        %v273 = vpop.f32.mrf.mxu0
        %v274 = vadd.f32 0.0, %v273
        %275 = vdwg.mxu0
        %v276 = vmax.f32 %v272, 0.0
        %v277 = vmax.f32 %v274, 0.0
        %v278 = vld [vmem:[%s2] sm:$0x7]
        %v279 = vld [vmem:[%s3] sm:$0x7]
        %281 = vset.pattern.permute.xlu0 0
        %282 = vperm.xlu0 %281, %v279
        %v283 = vpop.permute.xlu0 %282
        %vm285 = vcmask 130048
        %v287 = vsel %vm285, %v278, 0
        %289 = vmatpush.msra.mxu0 0.0
        %290 = vmatpush.msra.mxu0 0.0
        %291 = vmatpush.msra.mxu0 0.0
        %292 = vmatpush.msra.mxu0 0.0
        %293 = vmatpush.msra.mxu0 0.0
        %294 = vmatpush.msra.mxu0 0.0
        %295 = vmatpush.msra.mxu0 0.0
        %296 = vmatpush.msra.mxu0 0.0
        %297 = vmatpush.msra.mxu0 0.0
        %298 = vmatpush.msra.mxu0 0.0
        %299 = vmatpush.msra.mxu0 0.0
        %300 = vmatpush.msra.mxu0 0.0
        %301 = vmatpush.msra.mxu0 0.0
        %302 = vmatpush.msra.mxu0 0.0
        %303 = vmatpush.msra.mxu0 %v277
        %304 = vmatpush.msra.mxu0 %v276
        %305 = vmatmul.f32.gmra.mxu0 %v287
        %v306 = vpop.f32.mrf.mxu0
        %v307 = vadd.f32 %v283, %v306
        %308 = vdwg.mxu0
        %309 = vst [vmem:[%s233] sm:$0x7] %v307
        %s310 = sand.u32 %s119, 1
        %s311 = scalar_lea.sflag [#allocation4], %s310
        %s312 = sand.u32 %s119, 1
        %s313 = smul.addr %s312, 4
        %s314 = scalar_lea.vmem [#allocation7], %s313
        // Predicated region
        $region45: #{scn_head.1} parent=35 // pred_check
          %p315 = pneg %p129
        $region46: #{scn_head.1} parent=35 // pred_check_branch
          %317 = sbr.rel (%p315) target = $region48
        $region47: #{scn_head.1} parent=35 // pred_region
          %319 = vsyncadd %s311, 0
          %s320 = smul.addr %s22, 4
          %s321 = scalar_lea.hbm %s4, %s320
          %s323 = sshll.u32 %s314, 4
          %s324 = int_to_ptr.vmem [resolvable:$true] %s323
          %s325 = sshll.u32 %s321, 4
          %s326 = int_to_ptr.hbm [resolvable:$true] %s325
          %328 = dma.vmem_to_hbm [thread:$0]  %s324, 64, %s326, %s311
        $region48: #{scn_head.1} parent=35 // pred_fallthru
          _
      $region36: #{scn_head.1} parent=5 // pred_fallthru
        _
      %p329 = scmp.le.s32.totalorder 2, %s17
      // Predicated region
      $region49: #{scn_head.1} parent=5 // pred_check
        %p330 = pneg %p329
      $region50: #{scn_head.1} parent=5 // pred_check_branch
        %332 = sbr.rel (%p330) target = $region52
      $region51: #{scn_head.1} parent=5 // pred_region
        %s333 = ssub.s32 %s17, 2
        // Predicated region
        $region53: #{scn_head.1} parent=51 // pred_check
          %p334 = pneg %p135
        $region54: #{scn_head.1} parent=51 // pred_check_branch
          %336 = sbr.rel (%p334) target = $region56
        $region55: #{scn_head.1} parent=51 // pred_region
          %s337 = sand.u32 %s120, 1
          %s338 = scalar_lea.sflag [#allocation4], %s337
          %s339 = sand.u32 %s120, 1
          %s340 = smul.addr %s339, 4
          %s341 = scalar_lea.vmem [#allocation7], %s340
          %343 = dma.done %s338, 64
        $region56: #{scn_head.1} parent=51 // pred_fallthru
          _
      $region52: #{scn_head.1} parent=5 // pred_fallthru
        _
    $region6: #{scn_head.1} parent=1 // loop_footer
      %s21 = sadd.s32 1, %s17
    $region7: #{scn_head.1} parent=1 // loop_footer_branch
      %16 = sbr.rel target = $region3
    $region8: #{scn_head.1} parent=1 // loop_exit
      _
    %344 = vsyncpa [#allocation3], 1
    %s345 = scalar_lea.sflag [#allocation3], 1
    %346 = vsyncpa %s345, 1
    %347 = vsyncpa [#allocation6], 1
    %348 = vsyncpa [#allocation4], 1
    %s349 = scalar_lea.sflag [#allocation4], 1
    %350 = vsyncpa %s349, 1

</llo_original>
